<compile_context>
chip_gen: v6e
topology: v6e:2x2x1
jax: 0.10.0
libtpu: 0.0.40
codegen_flags: <defaults>
</compile_context>

<pallas_src>
import functools

import jax
import jax.numpy as jnp
from jax.experimental import pallas as pl
from jax.experimental.pallas import tpu as pltpu


def _triplet_block_kernel(a_ref, p_ref, n_ref, o_ref, *,
                          inv_tau, batch, block_rows, mask_rows):
    """One batch tile: row-wise cosine sims -> softplus -> partial sum.

    a_ref/p_ref/n_ref: (TB, Dp) blocks, Dp a multiple of 128 (lane-dense).
    o_ref: (8, 128) per-program partial-sum block (scalar splatted).
    """
    i = pl.program_id(0)

    a = a_ref[...].astype(jnp.float32)
    p = p_ref[...].astype(jnp.float32)
    n = n_ref[...].astype(jnp.float32)

    # Row-wise lane-axis reductions; ||anchor||^2 computed once and reused.
    dp = jnp.sum(a * p, axis=1, keepdims=True)       # (TB, 1)
    dn = jnp.sum(a * n, axis=1, keepdims=True)
    wa = jnp.sum(a * a, axis=1, keepdims=True)
    wp = jnp.sum(p * p, axis=1, keepdims=True)
    wn = jnp.sum(n * n, axis=1, keepdims=True)

    # torch.nn.functional.cosine_similarity: w12 / sqrt(clamp_min(w1*w2, eps^2)),
    # eps = 1e-8.  rsqrt keeps this on the (otherwise idle) EUP slot.
    eps2 = jnp.float32(1e-16)
    pos_sim = dp * jax.lax.rsqrt(jnp.maximum(wa * wp, eps2))
    neg_sim = dn * jax.lax.rsqrt(jnp.maximum(wa * wn, eps2))

    # -log(exp(p/tau) / (exp(p/tau) + exp(n/tau))) == softplus((n - p)/tau),
    # written in the overflow-safe form max(z,0) + log(1 + exp(-|z|)).
    z = (neg_sim - pos_sim) * jnp.float32(inv_tau)
    triplet = jnp.maximum(z, 0.0) + jnp.log(1.0 + jnp.exp(-jnp.abs(z)))  # (TB,1)

    if mask_rows:
        # Zero the contribution of rows padded past the true batch size.
        row = i * block_rows + jax.lax.broadcasted_iota(jnp.int32, triplet.shape, 0)
        triplet = jnp.where(row < batch, triplet, jnp.float32(0.0))

    part = jnp.sum(triplet, keepdims=True)            # (1, 1)
    # Lane-dense, unmasked store of the partial (splatted over the block).
    o_ref[...] = jnp.broadcast_to(part, o_ref.shape)


def triplet_loss_cos_sim(anchor, pos, neg, *, temperature=1.0, reduction="mean",
                         block_rows=None):
    """Forward of TripletLossInLatentSpaceCosSim (entropy_conditioning=False)."""
    if reduction not in ("mean", "sum"):
        raise Exception("Invalid reduction: {}".format(reduction))
    assert anchor.shape == pos.shape == neg.shape and anchor.ndim == 2
    B, D = anchor.shape
    # anchor.detach() in the reference is a no-op for the forward value.
    # TODO(synk): entropy_conditioning branch not implemented (the reference
    # module calls an undefined `entropy` there); default config is False.

    # Lane-dense feature dim (zero padding is inert for dots / squared norms).
    Dp = max(128, ((D + 127) // 128) * 128)

    # Batch tile: multiple of 8, capped so 3 inputs x 2 pipeline buffers fit
    # comfortably under the default scoped VMEM limit (v7x-safe sizing).
    itemsize = jnp.dtype(anchor.dtype).itemsize
    vmem_budget = 16 * 1024 * 1024
    cap = max(8, min(1024, (vmem_budget // (6 * Dp * itemsize)) // 8 * 8))
    if block_rows is None:
        block_rows = cap
    TB = min(((B + 7) // 8) * 8, max(8, (block_rows // 8) * 8))
    grid = (B + TB - 1) // TB
    Bp = grid * TB

    def _pad(x):
        if Bp == B and Dp == D:
            return x
        return jnp.pad(x, ((0, Bp - B), (0, Dp - D)))

    a, p, n = _pad(anchor), _pad(pos), _pad(neg)

    kernel = functools.partial(
        _triplet_block_kernel,
        inv_tau=1.0 / float(temperature),
        batch=B,
        block_rows=TB,
        mask_rows=(Bp != B),
    )

    cost = pl.CostEstimate(
        flops=10 * Bp * Dp,
        transcendentals=4 * Bp,
        bytes_accessed=3 * Bp * Dp * itemsize + grid * 8 * 128 * 4,
    )

    partials = pl.pallas_call(
        kernel,
        out_shape=jax.ShapeDtypeStruct((grid * 8, 128), jnp.float32),
        grid=(grid,),
        in_specs=[
            pl.BlockSpec((TB, Dp), lambda i: (i, 0)),
            pl.BlockSpec((TB, Dp), lambda i: (i, 0)),
            pl.BlockSpec((TB, Dp), lambda i: (i, 0)),
        ],
        out_specs=pl.BlockSpec((8, 128), lambda i: (i, 0)),
        compiler_params=pltpu.CompilerParams(
            dimension_semantics=("parallel",),
        ),
        cost_estimate=cost,
    )(a, p, n)

    total = jnp.sum(partials[0::8, 0])                # one scalar per program
    if reduction == "mean":
        total = total / jnp.float32(B)
    return total


def _reference(anchor, pos, neg, tau=1.0, reduction="mean"):
    # Pure-JAX port of the PyTorch module (torch cosine_similarity semantics).
    eps = 1e-8

    def cos_sim(x, y):
        w12 = jnp.sum(x * y, axis=1)
        w1 = jnp.sum(x * x, axis=1)
        w2 = jnp.sum(y * y, axis=1)
        return w12 / jnp.sqrt(jnp.maximum(w1 * w2, eps * eps))

    p = cos_sim(anchor, pos)
    n = cos_sim(anchor, neg)
    num = jnp.exp(p / tau)
    den = jnp.exp(p / tau) + jnp.exp(n / tau)
    t = -jnp.log(num / den)
    return jnp.mean(t) if reduction == "mean" else jnp.sum(t)


if __name__ == "__main__":
    key = jax.random.PRNGKey(0)
    k1, k2, k3, k4, k5, k6 = jax.random.split(key, 6)

    # Case 1: small module-sized shapes, single grid step after lane padding.
    B, D = 8, 32
    anchor = jax.random.normal(k1, (B, D), dtype=jnp.float32)
    pos = jax.random.normal(k2, (B, D), dtype=jnp.float32)
    neg = jax.random.normal(k3, (B, D), dtype=jnp.float32)
    loss = triplet_loss_cos_sim(anchor, pos, neg, temperature=1.0, reduction="mean")
    jax.block_until_ready(loss)
    ref = _reference(anchor, pos, neg, tau=1.0, reduction="mean")
    assert jnp.allclose(loss, ref, atol=1e-5, rtol=1e-4), (loss, ref)

    # Case 2: non-aligned shapes, multi-step grid, row masking, tau<1, sum.
    B2, D2 = 20, 48
    a2 = jax.random.normal(k4, (B2, D2), dtype=jnp.float32)
    p2 = jax.random.normal(k5, (B2, D2), dtype=jnp.float32)
    n2 = jax.random.normal(k6, (B2, D2), dtype=jnp.float32)
    loss2 = triplet_loss_cos_sim(a2, p2, n2, temperature=0.5, reduction="sum",
                                 block_rows=8)
    jax.block_until_ready(loss2)
    ref2 = _reference(a2, p2, n2, tau=0.5, reduction="sum")
    assert jnp.allclose(loss2, ref2, atol=1e-5, rtol=1e-4), (loss2, ref2)

    print("KERNEL_OK")
</pallas_src>

<mosaic_0001>
module attributes {stable_mosaic.version = 11 : i64} {
  func.func @_triplet_block_kernel(%arg0: i32, %arg1: memref<8x128xf32, #tpu.memory_space<vmem>>, %arg2: memref<8x128xf32, #tpu.memory_space<vmem>>, %arg3: memref<8x128xf32, #tpu.memory_space<vmem>>, %arg4: memref<8x128xf32, #tpu.memory_space<vmem>>) attributes {dimension_semantics = [#tpu.dimension_semantics<parallel>], iteration_bounds = array<i64: 1>, scalar_prefetch = 0 : i64, scratch_operands = 0 : i64, tpu.core_type = #tpu.core_type<tc>, window_params = [{transform_indices = @transform_0, window_bounds = array<i64: 8, 128>}, {transform_indices = @transform_1, window_bounds = array<i64: 8, 128>}, {transform_indices = @transform_2, window_bounds = array<i64: 8, 128>}, {transform_indices = @transform_3, window_bounds = array<i64: 8, 128>}]} {
    %c0 = arith.constant 0 : index
    %c0_0 = arith.constant 0 : index
    %0 = vector.load %arg1[%c0, %c0_0] : memref<8x128xf32, #tpu.memory_space<vmem>>, vector<8x128xf32>
    %c0_1 = arith.constant 0 : index
    %c0_2 = arith.constant 0 : index
    %1 = vector.load %arg2[%c0_1, %c0_2] : memref<8x128xf32, #tpu.memory_space<vmem>>, vector<8x128xf32>
    %c0_3 = arith.constant 0 : index
    %c0_4 = arith.constant 0 : index
    %2 = vector.load %arg3[%c0_3, %c0_4] : memref<8x128xf32, #tpu.memory_space<vmem>>, vector<8x128xf32>
    %3 = arith.mulf %0, %1 : vector<8x128xf32>
    %cst = arith.constant dense<0.000000e+00> : vector<8xf32>
    %4 = vector.multi_reduction <add>, %3, %cst [1] : vector<8x128xf32> to vector<8xf32>
    %5 = vector.shape_cast %4 : vector<8xf32> to vector<8x1xf32>
    %6 = arith.mulf %0, %2 : vector<8x128xf32>
    %cst_5 = arith.constant dense<0.000000e+00> : vector<8xf32>
    %7 = vector.multi_reduction <add>, %6, %cst_5 [1] : vector<8x128xf32> to vector<8xf32>
    %8 = vector.shape_cast %7 : vector<8xf32> to vector<8x1xf32>
    %9 = arith.mulf %0, %0 : vector<8x128xf32>
    %cst_6 = arith.constant dense<0.000000e+00> : vector<8xf32>
    %10 = vector.multi_reduction <add>, %9, %cst_6 [1] : vector<8x128xf32> to vector<8xf32>
    %11 = vector.shape_cast %10 : vector<8xf32> to vector<8x1xf32>
    %12 = arith.mulf %1, %1 : vector<8x128xf32>
    %cst_7 = arith.constant dense<0.000000e+00> : vector<8xf32>
    %13 = vector.multi_reduction <add>, %12, %cst_7 [1] : vector<8x128xf32> to vector<8xf32>
    %14 = vector.shape_cast %13 : vector<8xf32> to vector<8x1xf32>
    %15 = arith.mulf %2, %2 : vector<8x128xf32>
    %cst_8 = arith.constant dense<0.000000e+00> : vector<8xf32>
    %16 = vector.multi_reduction <add>, %15, %cst_8 [1] : vector<8x128xf32> to vector<8xf32>
    %17 = vector.shape_cast %16 : vector<8xf32> to vector<8x1xf32>
    %18 = arith.mulf %11, %14 : vector<8x1xf32>
    %cst_9 = arith.constant 1.000000e-16 : f32
    %19 = vector.broadcast %cst_9 : f32 to vector<8x1xf32>
    %20 = arith.maximumf %18, %19 : vector<8x1xf32>
    %21 = math.rsqrt %20 : vector<8x1xf32>
    %22 = arith.mulf %5, %21 : vector<8x1xf32>
    %23 = arith.mulf %11, %17 : vector<8x1xf32>
    %cst_10 = arith.constant 1.000000e-16 : f32
    %24 = vector.broadcast %cst_10 : f32 to vector<8x1xf32>
    %25 = arith.maximumf %23, %24 : vector<8x1xf32>
    %26 = math.rsqrt %25 : vector<8x1xf32>
    %27 = arith.mulf %8, %26 : vector<8x1xf32>
    %28 = arith.subf %27, %22 : vector<8x1xf32>
    %cst_11 = arith.constant 1.000000e+00 : f32
    %29 = vector.broadcast %cst_11 : f32 to vector<8x1xf32>
    %30 = arith.mulf %28, %29 : vector<8x1xf32>
    %cst_12 = arith.constant 0.000000e+00 : f32
    %31 = vector.broadcast %cst_12 : f32 to vector<8x1xf32>
    %32 = arith.maximumf %30, %31 : vector<8x1xf32>
    %33 = math.absf %30 : vector<8x1xf32>
    %cst_13 = arith.constant 0.000000e+00 : f32
    %34 = vector.broadcast %cst_13 : f32 to vector<8x1xf32>
    %35 = arith.subf %34, %33 : vector<8x1xf32>
    %36 = math.exp %35 : vector<8x1xf32>
    %cst_14 = arith.constant 1.000000e+00 : f32
    %37 = vector.broadcast %cst_14 : f32 to vector<8x1xf32>
    %38 = arith.addf %37, %36 : vector<8x1xf32>
    %39 = math.log %38 : vector<8x1xf32>
    %40 = arith.addf %32, %39 : vector<8x1xf32>
    %41 = vector.shape_cast %40 : vector<8x1xf32> to vector<1x8x1xf32>
    %cst_15 = arith.constant dense<0.000000e+00> : vector<1xf32>
    %42 = vector.multi_reduction <add>, %41, %cst_15 [1, 2] : vector<1x8x1xf32> to vector<1xf32>
    %43 = vector.shape_cast %42 : vector<1xf32> to vector<1x1x1xf32>
    %44 = vector.extract %43[0, 0, 0] : f32 from vector<1x1x1xf32>
    %45 = vector.broadcast %44 : f32 to vector<1x1xf32>
    %46 = vector.shape_cast %45 : vector<1x1xf32> to vector<1x1xf32>
    %47 = vector.broadcast %46 : vector<1x1xf32> to vector<8x128xf32>
    %c0_16 = arith.constant 0 : index
    %c0_17 = arith.constant 0 : index
    %48 = vector.load %arg4[%c0_16, %c0_17] : memref<8x128xf32, #tpu.memory_space<vmem>>, vector<8x128xf32>
    tpu.vector_store %arg4[%c0_16, %c0_17], %47 {strides = array<i32>} : memref<8x128xf32, #tpu.memory_space<vmem>>, vector<8x128xf32>,
    return
  }
  func.func @transform_0(%arg0: i32) -> (i32, i32) {
    %c0_i32 = arith.constant 0 : i32
    %c0_i32_0 = arith.constant 0 : i32
    return %arg0, %c0_i32 : i32, i32
  }
  func.func @transform_1(%arg0: i32) -> (i32, i32) {
    %c0_i32 = arith.constant 0 : i32
    %c0_i32_0 = arith.constant 0 : i32
    return %arg0, %c0_i32 : i32, i32
  }
  func.func @transform_2(%arg0: i32) -> (i32, i32) {
    %c0_i32 = arith.constant 0 : i32
    %c0_i32_0 = arith.constant 0 : i32
    return %arg0, %c0_i32 : i32, i32
  }
  func.func @transform_3(%arg0: i32) -> (i32, i32) {
    %c0_i32 = arith.constant 0 : i32
    %c0_i32_0 = arith.constant 0 : i32
    return %arg0, %c0_i32 : i32, i32
  }
}

</mosaic_0001>

<llo_original>
// kernel: tpu_custom_call.1
$region0: #{tpu_custom_call.1}
  #allocation0 [shape = 'u32[]', space=smem, size = 0x4, offset = 0x4, fixed_abs, tag = 'smem constant byte address 0x4 - core index']
  #allocation1 [shape = 'u32[144,128]{1,0:T(1,128)}', space=vmem, size = 0x12000, scoped, tag = 'internal scratch']
  %s0 = inlined_call_operand.hbm [shape: f32[8,128], index: 0, kind: input, shape index: {}]
  %s1 = inlined_call_operand.hbm [shape: f32[8,128], index: 1, kind: input, shape index: {}]
  %s2 = inlined_call_operand.hbm [shape: f32[8,128], index: 2, kind: input, shape index: {}]
  %s3 = inlined_call_operand.hbm [shape: f32[8,128], index: 3, kind: output, shape index: {}]
  %s4 = sld [smem:[#allocation0]]
  $region34: #{tpu_custom_call.1} parent=0
    _
  %s6 = ssub.s32 1, %s4
  %s7 = scalar_select 0, %s6, %s4
  $region1: #{tpu_custom_call.1} parent=0
    #allocation2 [shape = 'u8[4096]{0}', space=vmem, size = 0x1000, scoped, tag = 'input window, operand 0, single buffered']
    #allocation3 [shape = 's32[1]{0}', space=sflag, size = 0x4, scoped, tag = 'scoped memory for tpu_custom_call.1']
    #allocation4 [shape = 's32[1]{0}', space=sflag, size = 0x4, scoped, tag = 'scoped memory for tpu_custom_call.1']
    #allocation5 [shape = 'u8[4096]{0}', space=vmem, size = 0x1000, scoped, tag = 'input window, operand 1, single buffered']
    #allocation6 [shape = 's32[1]{0}', space=sflag, size = 0x4, scoped, tag = 'scoped memory for tpu_custom_call.1']
    #allocation7 [shape = 'u8[4096]{0}', space=vmem, size = 0x1000, scoped, tag = 'input window, operand 2, single buffered']
    #allocation8 [shape = 'u8[4096]{0}', space=vmem, size = 0x1000, scoped, tag = 'output window, operand 0, single buffered']
    %8 = vsyncpa [#allocation3], 0
    %9 = vsyncpa [#allocation6], 0
    %10 = vsyncpa [#allocation4], 0
    // Predicated region
    $region2: #{tpu_custom_call.1} parent=1 // pred_check
      _
    $region3: #{tpu_custom_call.1} parent=1 // pred_check_branch
      %12 = sbr.rel (0) target = $region5
    $region4: #{tpu_custom_call.1} parent=1 // pred_region
      %s14 = ssub.s32 128, 128
      %15 = vsyncadd [#allocation3], %s14
      %s17 = sshll.u32 [#allocation2], 4
      %s18 = int_to_ptr.vmem [resolvable:$true] %s17
      %20 = dma.hbm_to_vmem [thread:$0]  %s0, 128, %s18, [#allocation3]
    $region5: #{tpu_custom_call.1} parent=1 // pred_fallthru
      _
    // Predicated region
    $region6: #{tpu_custom_call.1} parent=1 // pred_check
      _
    $region7: #{tpu_custom_call.1} parent=1 // pred_check_branch
      %22 = sbr.rel (0) target = $region9
    $region8: #{tpu_custom_call.1} parent=1 // pred_region
      %s24 = ssub.s32 128, 128
      %25 = vsyncadd [#allocation6], %s24
      %s27 = sshll.u32 [#allocation5], 4
      %s28 = int_to_ptr.vmem [resolvable:$true] %s27
      %30 = dma.hbm_to_vmem [thread:$0]  %s1, 128, %s28, [#allocation6]
    $region9: #{tpu_custom_call.1} parent=1 // pred_fallthru
      _
    // Predicated region
    $region10: #{tpu_custom_call.1} parent=1 // pred_check
      _
    $region11: #{tpu_custom_call.1} parent=1 // pred_check_branch
      %32 = sbr.rel (0) target = $region13
    $region12: #{tpu_custom_call.1} parent=1 // pred_region
      %s34 = ssub.s32 128, 128
      %35 = vsyncadd [#allocation6], %s34
      %s37 = sshll.u32 [#allocation7], 4
      %s38 = int_to_ptr.vmem [resolvable:$true] %s37
      %40 = dma.hbm_to_vmem [thread:$0]  %s2, 128, %s38, [#allocation6]
    $region13: #{tpu_custom_call.1} parent=1 // pred_fallthru
      _
    // Predicated region
    $region14: #{tpu_custom_call.1} parent=1 // pred_check
      _
    $region15: #{tpu_custom_call.1} parent=1 // pred_check_branch
      %42 = sbr.rel (0) target = $region17
    $region16: #{tpu_custom_call.1} parent=1 // pred_region
      %43 = dma.done [#allocation3], 128
    $region17: #{tpu_custom_call.1} parent=1 // pred_fallthru
      _
    // Predicated region
    $region18: #{tpu_custom_call.1} parent=1 // pred_check
      _
    $region19: #{tpu_custom_call.1} parent=1 // pred_check_branch
      %45 = sbr.rel (0) target = $region21
    $region20: #{tpu_custom_call.1} parent=1 // pred_region
      %46 = dma.done [#allocation6], 128
    $region21: #{tpu_custom_call.1} parent=1 // pred_fallthru
      _
    // Predicated region
    $region22: #{tpu_custom_call.1} parent=1 // pred_check
      _
    $region23: #{tpu_custom_call.1} parent=1 // pred_check_branch
      %48 = sbr.rel (0) target = $region25
    $region24: #{tpu_custom_call.1} parent=1 // pred_region
      %49 = dma.done [#allocation6], 128
    $region25: #{tpu_custom_call.1} parent=1 // pred_fallthru
      _
    %v50 = vld [vmem:[#allocation2] sm:$0xff]
    %v51 = vld [vmem:[#allocation5] sm:$0xff]
    %v52 = vld [vmem:[#allocation7] sm:$0xff]
    %v53 = vmul.f32 %v50, %v51
    %54 = vadd.xlane.f32.xlu0 %v53
    %v55 = vpop.xlane.xlu0 %54
    %v56 = vmul.f32 %v50, %v52
    %57 = vadd.xlane.f32.xlu0 %v56
    %v58 = vpop.xlane.xlu0 %57
    %v59 = vmul.f32 %v50, %v50
    %60 = vadd.xlane.f32.xlu0 %v59
    %v61 = vpop.xlane.xlu0 %60
    %v62 = vmul.f32 %v51, %v51
    %63 = vadd.xlane.f32.xlu0 %v62
    %v64 = vpop.xlane.xlu0 %63
    %v65 = vmul.f32 %v52, %v52
    %66 = vadd.xlane.f32.xlu0 %v65
    %v67 = vpop.xlane.xlu0 %66
    %v68 = vmul.f32 %v61, %v64
    %v69 = vmax.f32 %v68, 1e-16
    %v70 = vrsqrt.pop %v69
    %v71 = vmul.f32 %v55, %v70
    %v72 = vmul.f32 %v61, %v67
    %v73 = vmax.f32 %v72, 1e-16
    %v74 = vrsqrt.pop %v73
    %v75 = vmul.f32 %v58, %v74
    %v76 = vsub.f32 %v75, %v71
    %v77 = vmax.f32 %v76, 0.0
    %v78 = vand.u32 2147483647, %v76
    %v79 = vsub.f32 0.0, %v78
    %v80 = vmul.f32 %v79, 1.442695
    %v81 = vpow.pop %v80
    %v82 = vadd.f32 %v81, 1.0
    %v83 = vlog2.pop %v82
    %v84 = vmul.f32 %v83, 0.6931472
    %v85 = vadd.f32 %v77, %v84
    %vm86 = vcmask 7168
    %v87 = vsel %vm86, %v85, 0.0
    %88 = vadd.xlane.f32.xlu0 %v87
    %v89 = vpop.xlane.xlu0 %88
    %v90 = vrot.slane %v89, 4
    %v91 = vadd.f32 %v89, %v90
    %v92 = vrot.slane %v91, 2
    %v93 = vadd.f32 %v91, %v92
    %v94 = vrot.slane %v93, 1
    %v95 = vadd.f32 %v93, %v94
    %s96 = vtos %v95
    %v97 = vstv %s96
    %98 = vst [vmem:[#allocation8] sm:$0xff] %v97
    // Predicated region
    $region26: #{tpu_custom_call.1} parent=1 // pred_check
      _
    $region27: #{tpu_custom_call.1} parent=1 // pred_check_branch
      %100 = sbr.rel (0) target = $region29
    $region28: #{tpu_custom_call.1} parent=1 // pred_region
      %s102 = ssub.s32 128, 128
      %103 = vsyncadd [#allocation4], %s102
      %s105 = sshll.u32 [#allocation8], 4
      %s106 = int_to_ptr.vmem [resolvable:$true] %s105
      %108 = dma.vmem_to_hbm [thread:$0]  %s106, 128, %s3, [#allocation4]
    $region29: #{tpu_custom_call.1} parent=1 // pred_fallthru
      _
    // Predicated region
    $region30: #{tpu_custom_call.1} parent=1 // pred_check
      _
    $region31: #{tpu_custom_call.1} parent=1 // pred_check_branch
      %110 = sbr.rel (0) target = $region33
    $region32: #{tpu_custom_call.1} parent=1 // pred_region
      %111 = dma.done [#allocation4], 128
    $region33: #{tpu_custom_call.1} parent=1 // pred_fallthru
      _
    %112 = vsyncpa [#allocation3], 1
    %113 = vsyncpa [#allocation6], 1
    %114 = vsyncpa [#allocation4], 1

</llo_original>
